<compile_context>
chip_gen: v6e
topology: v6e:2x2x1
jax: 0.10.0
libtpu: 0.0.40
codegen_flags: <defaults>
</compile_context>

<pallas_src>
import functools
import math

import jax
import jax.numpy as jnp
from jax.experimental import pallas as pl
from jax.experimental.pallas import tpu as pltpu


def _gate_kernel(bank_ref, feat_ref, wbt_ref, out_ref, *, add, scale, mxu_dtype):
    """One (R, H) row-block of the flattened (T*B, H) memory bank.

    bank_ref: (R, H) bank rows, native dtype.
    feat_ref: (R, H) pre-tiled feature gate (img @ Wf^T + bias); constant block
              index -> fetched once and reused for every grid step.
    wbt_ref : (H, H) bank_to_gate weight already transposed to [in, out] so the
              contraction is a plain rows @ Wb^T (no per-step weight transpose).
    """
    rows = bank_ref[...]                                          # (R, H)
    lhs = rows if mxu_dtype is None else rows.astype(mxu_dtype)
    bank_gate = jnp.dot(lhs, wbt_ref[...],
                        preferred_element_type=jnp.float32)       # (R, H) f32
    pre = bank_gate + feat_ref[...].astype(jnp.float32)
    if add == 0.0:
        gate = jax.nn.sigmoid(pre)                                # scale == 1
    else:
        gate = (jax.nn.sigmoid(pre) + add) * scale                # mul, no div
    if out_ref.dtype == jnp.float32:
        out_ref[...] = rows.astype(jnp.float32) * gate
    else:
        # Sub-32-bit epilogue: multiply at native width (bf16 VALUs on v6e/v7x)
        # instead of materialising an (R, H) f32 copy of the bank rows.
        out_ref[...] = (rows * gate.astype(rows.dtype)).astype(out_ref.dtype)


def _lcm(a, b):
    return a * b // math.gcd(a, b)


def _pick_rows(M, B, target_rows, bytes_per_row, vmem_budget):
    """Rows per block: multiple of B (feat-tiling alignment), sublane/MXU
    aligned, capped by target_rows and a VMEM budget, and split into >= 2
    blocks when possible so the 'parallel' grid axis feeds both v7x cores."""
    g = _lcm(B, 8)                         # sublane-aligned granule
    if M >= 2 * _lcm(B, 128):
        g = _lcm(B, 128)                   # full MXU passes when M is large
    max_rows = max(g, vmem_budget // max(1, bytes_per_row))
    R = min(target_rows, max_rows, M)
    R = max(g, (R // g) * g)
    if R >= M:
        if M >= 2 * g:
            R = ((M // 2 + g - 1) // g) * g   # two balanced, g-aligned blocks
        else:
            R = M
    return min(R, M)


def multimodal_memory_bank_gate(bank, img_feats, wb, wf, bias, *, add=0.0,
                                target_rows=1024, mxu_dtype=None):
    """Forward pass of MultiModalMemoryBankGate.

    bank:      (T, B, H)  memory bank (n_time, batch, bank_size)
    img_feats: (1, B, F)  image features (expanded over T by the module)
    wb:        (H, H)     bank_to_gate.weight  [out, in], no bias
    wf:        (H, F)     feat_to_gate.weight  [out, in]
    bias:      (H,)       feat_to_gate.bias    (constant-initialized to 1.0)
    add:       scalar     self.add
    mxu_dtype: optional reduced dtype (e.g. jnp.bfloat16) for the matmul
               operands only; the final bank*gate stays at bank precision.
    Returns (T, B, H).
    """
    T, B, H = bank.shape
    _, _, F = img_feats.shape
    M = T * B
    out_dtype = bank.dtype

    # t-invariant feature gate, hoisted out of the kernel (plain JAX, f32).
    feat = (jnp.einsum("bf,hf->bh", img_feats[0].astype(jnp.float32),
                       wf.astype(jnp.float32))
            + bias.astype(jnp.float32))                           # (B, H) f32

    # One-time XLA transpose so the kernel contracts rows @ Wb^T directly.
    if mxu_dtype is not None:
        wb = wb.astype(mxu_dtype)
    wb_t = jnp.transpose(wb)                                      # (H_in, H_out)

    itemsize = lambda dt: jnp.dtype(dt).itemsize
    feat_dtype = bank.dtype if itemsize(bank.dtype) < 4 else jnp.float32
    bytes_per_row = H * (2 * itemsize(bank.dtype) + 2 * itemsize(out_dtype)
                         + 2 * itemsize(feat_dtype))
    vmem_budget = (48 << 20) - 2 * H * H * itemsize(wb_t.dtype)
    R = _pick_rows(M, B, target_rows, bytes_per_row, max(vmem_budget, 1 << 20))
    n_blocks = pl.cdiv(M, R)

    # Pre-tiled feature gate block (constant index map -> DMA'd once); stored
    # in the bank dtype when sub-32-bit to halve its VMEM footprint (v7x).
    feat_block = jnp.tile(feat, (R // B, 1)).astype(feat_dtype)   # (R, H)
    bank2d = bank.reshape(M, H)

    kernel = functools.partial(_gate_kernel, add=float(add),
                               scale=1.0 / (1.0 + float(add)),
                               mxu_dtype=mxu_dtype)

    def run(single_buffer):
        # feat / Wb^T never change block index -> single-buffer them so their
        # VMEM budget goes to bigger (double-buffered) bank/out tiles instead.
        const_mode = dict(pipeline_mode=pl.Buffered(1)) if single_buffer else {}
        fbufs = 1 if single_buffer else 2
        vmem_bytes = (R * H * (2 * itemsize(bank.dtype) + 2 * itemsize(out_dtype)
                               + fbufs * itemsize(feat_dtype))
                      + fbufs * H * H * itemsize(wb_t.dtype))
        vmem_limit = int(min(64 << 20, max(32 << 20, 2 * vmem_bytes + (8 << 20))))
        return pl.pallas_call(
            kernel,
            out_shape=jax.ShapeDtypeStruct((M, H), out_dtype),
            grid_spec=pltpu.PrefetchScalarGridSpec(
                num_scalar_prefetch=0,
                grid=(n_blocks,),
                in_specs=[
                    pl.BlockSpec((R, H), lambda i: (i, 0)),                # bank rows
                    pl.BlockSpec((R, H), lambda i: (0, 0), **const_mode),  # feat gate
                    pl.BlockSpec((H, H), lambda i: (0, 0), **const_mode),  # Wb^T
                ],
                out_specs=pl.BlockSpec((R, H), lambda i: (i, 0)),
            ),
            compiler_params=pltpu.CompilerParams(
                dimension_semantics=("parallel",),
                vmem_limit_bytes=vmem_limit),
        )(bank2d, feat_block, wb_t)

    # Prefer single-buffered constant operands; fall back to default
    # double-buffering if this JAX build rejects pipeline_mode=Buffered(1).
    try:
        out2d = jax.block_until_ready(run(single_buffer=True))
    except Exception:
        out2d = jax.block_until_ready(run(single_buffer=False))

    # TODO(synk): when bank_size H < 128 the lane axis is under-filled (masked
    # partial stores at <100% lane utilization); folding (t, b) rows into the
    # lane axis / padding H to 128 would fix it but changes the Wb contraction
    # structure, so it is left as-is here.
    return out2d.reshape(T, B, H)


def _reference(bank, img_feats, wb, wf, bias, add=0.0):
    # Pure-JAX reference mirroring the PyTorch module.
    feat_gate = jnp.einsum("tbf,hf->tbh", img_feats, wf) + bias       # (1, B, H)
    feat_gate = jnp.broadcast_to(feat_gate, bank.shape)               # expand over T
    bank_gate = jnp.einsum("tbh,gh->tbg", bank, wb)
    gate = (jax.nn.sigmoid(feat_gate + bank_gate) + add) / (1.0 + add)
    return bank * gate


def _make_inputs(key, n_time, batch, bank_size, img_feat_size):
    k1, k2, k3, k4 = jax.random.split(key, 4)
    bank = jax.random.normal(k1, (n_time, batch, bank_size), dtype=jnp.float32)
    img_feats = jax.random.normal(k2, (1, batch, img_feat_size),
                                  dtype=jnp.float32)
    # Parameter shapes follow nn.Linear in __init__ ([out, in]).
    wb = jax.random.normal(k3, (bank_size, bank_size), dtype=jnp.float32) * 0.1
    wf = jax.random.normal(k4, (bank_size, img_feat_size),
                           dtype=jnp.float32) * 0.1
    bias = jnp.full((bank_size,), 1.0, dtype=jnp.float32)  # constant(bias, 1.0)
    return bank, img_feats, wb, wf, bias


if __name__ == "__main__":
    key = jax.random.PRNGKey(0)

    # Test 1: small shapes, add == 0, 2-block grid (megacore-friendly split).
    bank, img_feats, wb, wf, bias = _make_inputs(key, n_time=8, batch=2,
                                                 bank_size=32, img_feat_size=16)
    out = multimodal_memory_bank_gate(bank, img_feats, wb, wf, bias, add=0.0)
    out = jax.block_until_ready(out)
    ref = _reference(bank, img_feats, wb, wf, bias, add=0.0)
    assert out.shape == bank.shape
    assert jnp.allclose(out, ref, atol=1e-5, rtol=1e-5), "mismatch (add=0)"

    # Test 2: add != 0 (precomputed-scale path).
    out2 = multimodal_memory_bank_gate(bank, img_feats, wb, wf, bias, add=0.5)
    out2 = jax.block_until_ready(out2)
    ref2 = _reference(bank, img_feats, wb, wf, bias, add=0.5)
    assert jnp.allclose(out2, ref2, atol=1e-5, rtol=1e-5), "mismatch (add=0.5)"

    # Test 3: multi-block grid with a partial last block.
    bank3, img3, wb3, wf3, bias3 = _make_inputs(jax.random.PRNGKey(1),
                                                n_time=40, batch=2,
                                                bank_size=32, img_feat_size=16)
    out3 = multimodal_memory_bank_gate(bank3, img3, wb3, wf3, bias3,
                                       add=0.0, target_rows=64)
    out3 = jax.block_until_ready(out3)
    ref3 = _reference(bank3, img3, wb3, wf3, bias3, add=0.0)
    assert jnp.allclose(out3, ref3, atol=1e-5, rtol=1e-5), "mismatch (tiled)"

    # Test 4: bf16 bank/params — native-dtype MXU, bf16 epilogue, lane-dense H.
    bank4, img4, wb4, wf4, bias4 = _make_inputs(jax.random.PRNGKey(2),
                                                n_time=32, batch=2,
                                                bank_size=128, img_feat_size=64)
    to_bf16 = lambda x: x.astype(jnp.bfloat16)
    out4 = multimodal_memory_bank_gate(to_bf16(bank4), to_bf16(img4),
                                       to_bf16(wb4), to_bf16(wf4),
                                       to_bf16(bias4), add=0.25)
    out4 = jax.block_until_ready(out4)
    ref4 = _reference(to_bf16(bank4).astype(jnp.float32),
                      to_bf16(img4).astype(jnp.float32),
                      to_bf16(wb4).astype(jnp.float32),
                      to_bf16(wf4).astype(jnp.float32),
                      to_bf16(bias4).astype(jnp.float32), add=0.25)
    assert jnp.allclose(out4.astype(jnp.float32), ref4,
                        atol=5e-2, rtol=5e-2), "mismatch (bf16)"

    print("KERNEL_OK")
</pallas_src>

<mosaic_0001>
module attributes {stable_mosaic.version = 11 : i64} {
  func.func @_gate_kernel(%arg0: i32, %arg1: memref<8x32xf32, #tpu.memory_space<vmem>>, %arg2: memref<8x32xf32, #tpu.memory_space<vmem>>, %arg3: memref<32x32xf32, #tpu.memory_space<vmem>>, %arg4: memref<8x32xf32, #tpu.memory_space<vmem>>) attributes {dimension_semantics = [#tpu.dimension_semantics<parallel>], iteration_bounds = array<i64: 2>, scalar_prefetch = 0 : i64, scratch_operands = 0 : i64, tpu.core_type = #tpu.core_type<tc>, window_params = [{transform_indices = @transform_0, window_bounds = array<i64: 8, 32>}, {pipeline_mode = #tpu.pipeline_mode<synchronous>, transform_indices = @transform_1, window_bounds = array<i64: 8, 32>}, {pipeline_mode = #tpu.pipeline_mode<synchronous>, transform_indices = @transform_2, window_bounds = array<i64: 32, 32>}, {transform_indices = @transform_3, window_bounds = array<i64: 8, 32>}]} {
    %c0 = arith.constant 0 : index
    %c0_0 = arith.constant 0 : index
    %0 = vector.load %arg1[%c0, %c0_0] : memref<8x32xf32, #tpu.memory_space<vmem>>, vector<8x32xf32>
    %c0_1 = arith.constant 0 : index
    %c0_2 = arith.constant 0 : index
    %1 = vector.load %arg3[%c0_1, %c0_2] : memref<32x32xf32, #tpu.memory_space<vmem>>, vector<32x32xf32>
    %cst = arith.constant dense<0.000000e+00> : vector<8x32xf32>
    %2 = tpu.matmul %0, %1, %cst {dimension_numbers = #tpu.dot_dimension_numbers<[1], [0], [0], [1], [0, 0, 1, 1], [], []>} : vector<8x32xf32>, vector<32x32xf32>, vector<8x32xf32> -> vector<8x32xf32>
    %c0_3 = arith.constant 0 : index
    %c0_4 = arith.constant 0 : index
    %3 = vector.load %arg2[%c0_3, %c0_4] : memref<8x32xf32, #tpu.memory_space<vmem>>, vector<8x32xf32>
    %4 = arith.addf %2, %3 : vector<8x32xf32>
    %5 = arith.negf %4 : vector<8x32xf32>
    %6 = math.exp %5 : vector<8x32xf32>
    %cst_5 = arith.constant 1.000000e+00 : f32
    %7 = vector.broadcast %cst_5 : f32 to vector<8x32xf32>
    %8 = arith.addf %7, %6 : vector<8x32xf32>
    %9 = arith.divf %7, %8 : vector<8x32xf32>
    %10 = arith.mulf %0, %9 : vector<8x32xf32>
    %c0_6 = arith.constant 0 : index
    %c0_7 = arith.constant 0 : index
    %11 = vector.load %arg4[%c0_6, %c0_7] : memref<8x32xf32, #tpu.memory_space<vmem>>, vector<8x32xf32>
    tpu.vector_store %arg4[%c0_6, %c0_7], %10 {strides = array<i32>} : memref<8x32xf32, #tpu.memory_space<vmem>>, vector<8x32xf32>,
    return
  }
  func.func @transform_0(%arg0: i32) -> (i32, i32) {
    %c0_i32 = arith.constant 0 : i32
    %c0_i32_0 = arith.constant 0 : i32
    return %arg0, %c0_i32 : i32, i32
  }
  func.func @transform_1(%arg0: i32) -> (i32, i32) {
    %c0_i32 = arith.constant 0 : i32
    %c0_i32_0 = arith.constant 0 : i32
    %c0_i32_1 = arith.constant 0 : i32
    return %c0_i32, %c0_i32_0 : i32, i32
  }
  func.func @transform_2(%arg0: i32) -> (i32, i32) {
    %c0_i32 = arith.constant 0 : i32
    %c0_i32_0 = arith.constant 0 : i32
    %c0_i32_1 = arith.constant 0 : i32
    return %c0_i32, %c0_i32_0 : i32, i32
  }
  func.func @transform_3(%arg0: i32) -> (i32, i32) {
    %c0_i32 = arith.constant 0 : i32
    %c0_i32_0 = arith.constant 0 : i32
    return %arg0, %c0_i32 : i32, i32
  }
}

module attributes {stable_mosaic.version = 11 : i64} {
  func.func @_gate_kernel(%arg0: i32, %arg1: memref<8x32xf32, #tpu.memory_space<vmem>>, %arg2: memref<8x32xf32, #tpu.memory_space<vmem>>, %arg3: memref<32x32xf32, #tpu.memory_space<vmem>>, %arg4: memref<8x32xf32, #tpu.memory_space<vmem>>) attributes {dimension_semantics = [#tpu.dimension_semantics<parallel>], iteration_bounds = array<i64: 2>, scalar_prefetch = 0 : i64, scratch_operands = 0 : i64, tpu.core_type = #tpu.core_type<tc>, window_params = [{transform_indices = @transform_0, window_bounds = array<i64: 8, 32>}, {pipeline_mode = #tpu.pipeline_mode<synchronous>, transform_indices = @transform_1, window_bounds = array<i64: 8, 32>}, {pipeline_mode = #tpu.pipeline_mode<synchronous>, transform_indices = @transform_2, window_bounds = array<i64: 32, 32>}, {transform_indices = @transform_3, window_bounds = array<i64: 8, 32>}]} {
    %c0 = arith.constant 0 : index
    %c0_0 = arith.constant 0 : index
    %0 = vector.load %arg1[%c0, %c0_0] : memref<8x32xf32, #tpu.memory_space<vmem>>, vector<8x32xf32>
    %c0_1 = arith.constant 0 : index
    %c0_2 = arith.constant 0 : index
    %1 = vector.load %arg3[%c0_1, %c0_2] : memref<32x32xf32, #tpu.memory_space<vmem>>, vector<32x32xf32>
    %cst = arith.constant dense<0.000000e+00> : vector<8x32xf32>
    %2 = tpu.matmul %0, %1, %cst {dimension_numbers = #tpu.dot_dimension_numbers<[1], [0], [0], [1], [0, 0, 1, 1], [], []>} : vector<8x32xf32>, vector<32x32xf32>, vector<8x32xf32> -> vector<8x32xf32>
    %c0_3 = arith.constant 0 : index
    %c0_4 = arith.constant 0 : index
    %3 = vector.load %arg2[%c0_3, %c0_4] : memref<8x32xf32, #tpu.memory_space<vmem>>, vector<8x32xf32>
    %4 = arith.addf %2, %3 : vector<8x32xf32>
    %5 = arith.negf %4 : vector<8x32xf32>
    %6 = math.exp %5 : vector<8x32xf32>
    %cst_5 = arith.constant 1.000000e+00 : f32
    %7 = vector.broadcast %cst_5 : f32 to vector<8x32xf32>
    %8 = arith.addf %7, %6 : vector<8x32xf32>
    %9 = arith.divf %7, %8 : vector<8x32xf32>
    %10 = arith.mulf %0, %9 : vector<8x32xf32>
    %c0_6 = arith.constant 0 : index
    %c0_7 = arith.constant 0 : index
    %11 = vector.load %arg4[%c0_6, %c0_7] : memref<8x32xf32, #tpu.memory_space<vmem>>, vector<8x32xf32>
    tpu.vector_store %arg4[%c0_6, %c0_7], %10 {strides = array<i32>} : memref<8x32xf32, #tpu.memory_space<vmem>>, vector<8x32xf32>,
    return
  }
  func.func @transform_0(%arg0: i32) -> (i32, i32) {
    %c0_i32 = arith.constant 0 : i32
    %c0_i32_0 = arith.constant 0 : i32
    return %arg0, %c0_i32 : i32, i32
  }
  func.func @transform_1(%arg0: i32) -> (i32, i32) {
    %c0_i32 = arith.constant 0 : i32
    %c0_i32_0 = arith.constant 0 : i32
    %c0_i32_1 = arith.constant 0 : i32
    return %c0_i32, %c0_i32_0 : i32, i32
  }
  func.func @transform_2(%arg0: i32) -> (i32, i32) {
    %c0_i32 = arith.constant 0 : i32
    %c0_i32_0 = arith.constant 0 : i32
    %c0_i32_1 = arith.constant 0 : i32
    return %c0_i32, %c0_i32_0 : i32, i32
  }
  func.func @transform_3(%arg0: i32) -> (i32, i32) {
    %c0_i32 = arith.constant 0 : i32
    %c0_i32_0 = arith.constant 0 : i32
    return %arg0, %c0_i32 : i32, i32
  }
}

</mosaic_0001>

<llo_original>
// kernel: tpu_custom_call.1
$region0: #{tpu_custom_call.1}
  #allocation0 [shape = 'u32[]', space=smem, size = 0x4, offset = 0x4, fixed_abs, tag = 'smem constant byte address 0x4 - core index']
  #allocation1 [shape = 'u32[144,128]{1,0:T(1,128)}', space=vmem, size = 0x12000, scoped, tag = 'internal scratch']
  %s0 = inlined_call_operand.hbm [shape: f32[16,32], index: 0, kind: input, shape index: {}]
  %s1 = inlined_call_operand.hbm [shape: f32[8,32], index: 1, kind: input, shape index: {}]
  %s2 = inlined_call_operand.hbm [shape: f32[32,32], index: 2, kind: input, shape index: {}]
  %s3 = inlined_call_operand.hbm [shape: f32[16,32], index: 3, kind: output, shape index: {}]
  %s4 = sld [smem:[#allocation0]]
  $region57: #{tpu_custom_call.1} parent=0
    _
  %s6 = ssub.s32 1, %s4
  %s7 = scalar_select 0, %s6, %s4
  $region1: #{tpu_custom_call.1} parent=0
    #allocation2 [shape = 'u8[8192]{0}', space=vmem, size = 0x2000, scoped, tag = 'input window, operand 0']
    #allocation3 [shape = 's32[2]{0}', space=sflag, size = 0x8, scoped, tag = 'scoped memory for tpu_custom_call.1']
    #allocation4 [shape = 's32[2]{0}', space=sflag, size = 0x8, scoped, tag = 'scoped memory for tpu_custom_call.1']
    #allocation5 [shape = 'u8[4096]{0}', space=vmem, size = 0x1000, scoped, tag = 'input window, operand 1, single buffered']
    #allocation6 [shape = 's32[1]{0}', space=sflag, size = 0x4, scoped, tag = 'scoped memory for tpu_custom_call.1']
    #allocation7 [shape = 'u8[16384]{0}', space=vmem, size = 0x4000, scoped, tag = 'input window, operand 2, single buffered']
    #allocation8 [shape = 'u8[8192]{0}', space=vmem, size = 0x2000, scoped, tag = 'output window, operand 0']
    %8 = vsyncpa [#allocation3], 0
    %s9 = scalar_lea.sflag [#allocation3], 1
    %10 = vsyncpa %s9, 0
    %11 = vsyncpa [#allocation6], 0
    %12 = vsyncpa [#allocation4], 0
    %s13 = scalar_lea.sflag [#allocation4], 1
    %14 = vsyncpa %s13, 0
    loop: start=0, step=1, limit=4
    $region2: #{tpu_custom_call.1} parent=1 // loop_pre_header
      _
    $region3: #{tpu_custom_call.1} parent=1 // loop_header
      %s16 = sphi 0, %s20
      %p17 = scmp.ge.s32.totalorder %s16, 4
      %s26 = sphi 0, %s28
      %s29 = sphi 0, %s26
      %s30 = sphi 0, %s29
      %s46 = sphi 0, %s30
      %s50 = sphi 0, %s50
      %s52 = sphi 0, %s50
      %s53 = sphi 0, %s52
      %s67 = sphi 0, %s53
      %s71 = sphi 0, %s71
      %s73 = sphi 0, %s71
      %s74 = sphi 0, %s73
      %s88 = sphi 0, %s74
      %s94 = sphi 0, %s96
      %s97 = sphi 0, %s94
      %s98 = sphi 0, %s97
      %s114 = sphi 0, %s98
    $region4: #{tpu_custom_call.1} parent=1 // loop_header_branch
      %19 = sbr.rel (%p17) target = $region8
    $region5: #{tpu_custom_call.1} parent=1 // loop_body
      %s21 = ssub.s32 %s16, 1
      %s22 = ssub.s32 %s16, 2
      %s23 = sadd.s32 %s16, 1
      %s24 = ssub.s32 %s16, %s23
      %p25 = scmp.eq.s32.totalorder %s24, 0
      %s27 = sadd.s32 %s26, 1
      %s28 = scalar_select %p25, %s26, %s27
      %p31 = pneg %p25
      %p32 = scmp.eq.s32.totalorder %s16, 1
      %p33 = por %p31, %p32
      %p34 = scmp.ne.s32.totalorder %s26, %s29
      %p35 = scmp.eq.s32.totalorder %s16, 0
      %p36 = por %p34, %p35
      %p37 = scmp.ne.s32.totalorder %s26, %s29
      %p38 = scmp.eq.s32.totalorder %s21, 1
      %p39 = por %p37, %p38
      %p40 = scmp.ne.s32.totalorder %s29, %s30
      %p41 = scmp.eq.s32.totalorder %s21, 0
      %p42 = por %p40, %p41
      %p43 = scmp.ne.s32.totalorder %s29, %s30
      %p44 = scmp.eq.s32.totalorder %s22, 1
      %p45 = por %p43, %p44
      %p47 = scmp.ne.s32.totalorder %s30, %s46
      %p48 = scmp.eq.s32.totalorder %s22, 0
      %p49 = por %p47, %p48
      %s51 = sadd.s32 %s50, 1
      %p54 = scmp.eq.s32.totalorder %s16, 1
      %p55 = scmp.ne.s32.totalorder %s50, %s52
      %p56 = scmp.eq.s32.totalorder %s16, 0
      %p57 = por %p55, %p56
      %p58 = scmp.ne.s32.totalorder %s50, %s52
      %p59 = scmp.eq.s32.totalorder %s21, 1
      %p60 = por %p58, %p59
      %p61 = scmp.ne.s32.totalorder %s52, %s53
      %p62 = scmp.eq.s32.totalorder %s21, 0
      %p63 = por %p61, %p62
      %p64 = scmp.ne.s32.totalorder %s52, %s53
      %p65 = scmp.eq.s32.totalorder %s22, 1
      %p66 = por %p64, %p65
      %p68 = scmp.ne.s32.totalorder %s53, %s67
      %p69 = scmp.eq.s32.totalorder %s22, 0
      %p70 = por %p68, %p69
      %s72 = sadd.s32 %s71, 1
      %p75 = scmp.eq.s32.totalorder %s16, 1
      %p76 = scmp.ne.s32.totalorder %s71, %s73
      %p77 = scmp.eq.s32.totalorder %s16, 0
      %p78 = por %p76, %p77
      %p79 = scmp.ne.s32.totalorder %s71, %s73
      %p80 = scmp.eq.s32.totalorder %s21, 1
      %p81 = por %p79, %p80
      %p82 = scmp.ne.s32.totalorder %s73, %s74
      %p83 = scmp.eq.s32.totalorder %s21, 0
      %p84 = por %p82, %p83
      %p85 = scmp.ne.s32.totalorder %s73, %s74
      %p86 = scmp.eq.s32.totalorder %s22, 1
      %p87 = por %p85, %p86
      %p89 = scmp.ne.s32.totalorder %s74, %s88
      %p90 = scmp.eq.s32.totalorder %s22, 0
      %p91 = por %p89, %p90
      %s92 = ssub.s32 %s16, %s23
      %p93 = scmp.eq.s32.totalorder %s92, 0
      %s95 = sadd.s32 %s94, 1
      %s96 = scalar_select %p93, %s94, %s95
      %p99 = pneg %p93
      %p100 = scmp.eq.s32.totalorder %s16, 1
      %p101 = por %p99, %p100
      %p102 = scmp.ne.s32.totalorder %s94, %s97
      %p103 = scmp.eq.s32.totalorder %s16, 0
      %p104 = por %p102, %p103
      %p105 = scmp.ne.s32.totalorder %s94, %s97
      %p106 = scmp.eq.s32.totalorder %s21, 1
      %p107 = por %p105, %p106
      %p108 = scmp.ne.s32.totalorder %s97, %s98
      %p109 = scmp.eq.s32.totalorder %s21, 0
      %p110 = por %p108, %p109
      %p111 = scmp.ne.s32.totalorder %s97, %s98
      %p112 = scmp.eq.s32.totalorder %s22, 1
      %p113 = por %p111, %p112
      %p115 = scmp.ne.s32.totalorder %s98, %s114
      %p116 = scmp.eq.s32.totalorder %s22, 0
      %p117 = por %p115, %p116
      %p118 = scmp.le.s32.totalorder 1, %s16
      %p119 = scmp.lt.s32.totalorder %s16, 3
      %p120 = pnand %p118, %p119
      %p121 = pneg %p120
      // Predicated region
      $region9: #{tpu_custom_call.1} parent=5 // pred_check
        _
      $region10: #{tpu_custom_call.1} parent=5 // pred_check_branch
        %123 = sbr.rel (%p120) target = $region12
      $region11: #{tpu_custom_call.1} parent=5 // pred_region
        %s124 = ssub.s32 %s16, 1
        // Predicated region
        $region13: #{tpu_custom_call.1} parent=11 // pred_check
          %p125 = pneg %p63
        $region14: #{tpu_custom_call.1} parent=11 // pred_check_branch
          %127 = sbr.rel (%p125) target = $region16
        $region15: #{tpu_custom_call.1} parent=11 // pred_region
          %s129 = ssub.s32 128, 128
          %130 = vsyncadd [#allocation6], %s129
          %s132 = sshll.u32 [#allocation5], 4
          %s133 = int_to_ptr.vmem [resolvable:$true] %s132
          %135 = dma.hbm_to_vmem [thread:$0]  %s1, 128, %s133, [#allocation6]
        $region16: #{tpu_custom_call.1} parent=11 // pred_fallthru
          _
        // Predicated region
        $region17: #{tpu_custom_call.1} parent=11 // pred_check
          %p136 = pneg %p84
        $region18: #{tpu_custom_call.1} parent=11 // pred_check_branch
          %138 = sbr.rel (%p136) target = $region20
        $region19: #{tpu_custom_call.1} parent=11 // pred_region
          %s140 = ssub.s32 512, 512
          %141 = vsyncadd [#allocation6], %s140
          %s142 = sshll.u32 [#allocation7], 4
          %s143 = int_to_ptr.vmem [resolvable:$true] %s142
          %148 = dma.hbm_to_vmem [thread:$0]  %s2, 512, %s143, [#allocation6], 128, 128, 8
        $region20: #{tpu_custom_call.1} parent=11 // pred_fallthru
          _
      $region12: #{tpu_custom_call.1} parent=5 // pred_fallthru
        _
      %p149 = scmp.lt.s32.totalorder %s16, 2
      // Predicated region
      $region21: #{tpu_custom_call.1} parent=5 // pred_check
        %p150 = pneg %p149
      $region22: #{tpu_custom_call.1} parent=5 // pred_check_branch
        %152 = sbr.rel (%p150) target = $region24
      $region23: #{tpu_custom_call.1} parent=5 // pred_region
        // Predicated region
        $region25: #{tpu_custom_call.1} parent=23 // pred_check
          %p153 = pneg %p36
        $region26: #{tpu_custom_call.1} parent=23 // pred_check_branch
          %155 = sbr.rel (%p153) target = $region28
        $region27: #{tpu_custom_call.1} parent=23 // pred_region
          %s156 = sand.u32 %s26, 1
          %s157 = scalar_lea.sflag [#allocation3], %s156
          %s158 = sand.u32 %s26, 1
          %s159 = smul.addr %s158, 8
          %s160 = scalar_lea.vmem [#allocation2], %s159
          %s162 = ssub.s32 128, 128
          %163 = vsyncadd %s157, %s162
          %s164 = smul.addr %s16, 128
          %s165 = scalar_lea.hbm %s0, %s164
          %s167 = sshll.u32 %s160, 4
          %s168 = int_to_ptr.vmem [resolvable:$true] %s167
          %170 = dma.hbm_to_vmem [thread:$0]  %s165, 128, %s168, %s157
        $region28: #{tpu_custom_call.1} parent=23 // pred_fallthru
          _
      $region24: #{tpu_custom_call.1} parent=5 // pred_fallthru
        _
      %p171 = scmp.le.s32.totalorder 1, %s16
      %p172 = scmp.lt.s32.totalorder %s16, 3
      %p173 = pnand %p171, %p172
      %p174 = pneg %p173
      // Predicated region
      $region29: #{tpu_custom_call.1} parent=5 // pred_check
        _
      $region30: #{tpu_custom_call.1} parent=5 // pred_check_branch
        %176 = sbr.rel (%p173) target = $region32
      $region31: #{tpu_custom_call.1} parent=5 // pred_region
        %s177 = ssub.s32 %s16, 1
        %s178 = sand.u32 %s29, 1
        %s179 = scalar_lea.sflag [#allocation3], %s178
        %s180 = sand.u32 %s29, 1
        %s181 = smul.addr %s180, 8
        %s182 = scalar_lea.vmem [#allocation2], %s181
        // Predicated region
        $region33: #{tpu_custom_call.1} parent=31 // pred_check
          %p183 = pneg %p42
        $region34: #{tpu_custom_call.1} parent=31 // pred_check_branch
          %185 = sbr.rel (%p183) target = $region36
        $region35: #{tpu_custom_call.1} parent=31 // pred_region
          %186 = dma.done %s179, 128
        $region36: #{tpu_custom_call.1} parent=31 // pred_fallthru
          _
        // Predicated region
        $region37: #{tpu_custom_call.1} parent=31 // pred_check
          %p187 = pneg %p63
        $region38: #{tpu_custom_call.1} parent=31 // pred_check_branch
          %189 = sbr.rel (%p187) target = $region40
        $region39: #{tpu_custom_call.1} parent=31 // pred_region
          %190 = dma.done [#allocation6], 128
        $region40: #{tpu_custom_call.1} parent=31 // pred_fallthru
          _
        // Predicated region
        $region41: #{tpu_custom_call.1} parent=31 // pred_check
          %p191 = pneg %p84
        $region42: #{tpu_custom_call.1} parent=31 // pred_check_branch
          %193 = sbr.rel (%p191) target = $region44
        $region43: #{tpu_custom_call.1} parent=31 // pred_region
          %194 = dma.done [#allocation6], 512
        $region44: #{tpu_custom_call.1} parent=31 // pred_fallthru
          _
        %s195 = sand.u32 %s29, 1
        %s196 = scalar_lea.sflag [#allocation3], %s195
        %s197 = sand.u32 %s29, 1
        %s198 = smul.addr %s197, 8
        %s199 = scalar_lea.vmem [#allocation2], %s198
        %p200 = pneg %p42
        %p201 = pneg %p39
        %p202 = pneg %p63
        %p203 = pneg %p60
        %p204 = pneg %p84
        %p205 = pneg %p81
        %p206 = pneg %p110
        %p207 = pneg %p107
        %s208 = sand.u32 %s97, 1
        %s209 = scalar_lea.sflag [#allocation4], %s208
        %s210 = sand.u32 %s97, 1
        %s211 = smul.addr %s210, 8
        %s212 = scalar_lea.vmem [#allocation8], %s211
        %v213 = vld [vmem:[%s182] sm:$0xff]
        %v214 = vld [vmem:[#allocation7] sm:$0xff]
        %v215 = vld [vmem:[#allocation7 + $0x8] sm:$0xff]
        %v216 = vld [vmem:[#allocation7 + $0x10] sm:$0xff]
        %v217 = vld [vmem:[#allocation7 + $0x18] sm:$0xff]
        %v218 = vld [vmem:[#allocation5] sm:$0xff]
        %vm219 = vcmask 261120
        %v221 = vsel %vm219, %v213, 0
        %223 = vmatprep.subr.mxu0 0.0
        %224 = vmatpush1.msra.mxu0 0.0
        %225 = vmatprep.subr.mxu0 0.0
        %226 = vmatpush1.msra.mxu0 0.0
        %227 = vmatprep.subr.mxu0 0.0
        %228 = vmatpush1.msra.mxu0 0.0
        %229 = vmatprep.subr.mxu0 0.0
        %230 = vmatpush1.msra.mxu0 0.0
        %231 = vmatprep.subr.mxu0 0.0
        %232 = vmatpush1.msra.mxu0 0.0
        %233 = vmatprep.subr.mxu0 0.0
        %234 = vmatpush1.msra.mxu0 0.0
        %235 = vmatprep.subr.mxu0 0.0
        %236 = vmatpush1.msra.mxu0 0.0
        %237 = vmatprep.subr.mxu0 0.0
        %238 = vmatpush1.msra.mxu0 0.0
        %239 = vmatprep.subr.mxu0 0.0
        %240 = vmatpush1.msra.mxu0 0.0
        %241 = vmatprep.subr.mxu0 0.0
        %242 = vmatpush1.msra.mxu0 0.0
        %243 = vmatprep.subr.mxu0 0.0
        %244 = vmatpush1.msra.mxu0 0.0
        %245 = vmatprep.subr.mxu0 0.0
        %246 = vmatpush1.msra.mxu0 0.0
        %247 = vmatprep.subr.mxu0 0.0
        %248 = vmatpush1.msra.mxu0 %v217
        %249 = vmatprep.subr.mxu0 0.0
        %250 = vmatpush1.msra.mxu0 %v216
        %251 = vmatprep.subr.mxu0 0.0
        %252 = vmatpush1.msra.mxu0 %v215
        %253 = vmatprep.subr.mxu0 0.0
        %254 = vmatpush1.msra.mxu0 %v214
        %255 = vmatprep.subr.mxu0 0.0
        %256 = vmatpush2.msra.mxu0 0.0
        %257 = vmatprep.subr.mxu0 0.0
        %258 = vmatpush2.msra.mxu0 0.0
        %259 = vmatprep.subr.mxu0 0.0
        %260 = vmatpush2.msra.mxu0 0.0
        %261 = vmatprep.subr.mxu0 0.0
        %262 = vmatpush2.msra.mxu0 0.0
        %263 = vmatprep.subr.mxu0 0.0
        %264 = vmatpush2.msra.mxu0 0.0
        %265 = vmatprep.subr.mxu0 0.0
        %266 = vmatpush2.msra.mxu0 0.0
        %267 = vmatprep.subr.mxu0 0.0
        %268 = vmatpush2.msra.mxu0 0.0
        %269 = vmatprep.subr.mxu0 0.0
        %270 = vmatpush2.msra.mxu0 0.0
        %271 = vmatprep.subr.mxu0 0.0
        %272 = vmatpush2.msra.mxu0 0.0
        %273 = vmatprep.subr.mxu0 0.0
        %274 = vmatpush2.msra.mxu0 0.0
        %275 = vmatprep.subr.mxu0 0.0
        %276 = vmatpush2.msra.mxu0 0.0
        %277 = vmatprep.subr.mxu0 0.0
        %278 = vmatpush2.msra.mxu0 0.0
        %279 = vmatprep.subr.mxu0 0.0
        %280 = vmatpush2.msra.mxu0 0.0
        %281 = vmatprep.subr.mxu0 0.0
        %282 = vmatpush2.msra.mxu0 0.0
        %283 = vmatprep.subr.mxu0 0.0
        %284 = vmatpush2.msra.mxu0 0.0
        %285 = vmatprep.subr.mxu0 0.0
        %286 = vmatpush2.msra.mxu0 0.0
        %287 = vmatprep.mubr.f32.mxu0 0.0
        %288 = vmatmul.mubr.f32.gmra.mxu0 %v221
        %v289 = vpop.f32.mrf.mxu0
        %v290 = vadd.f32 %v218, %v289
        %v291 = vpop.f32.mrf.mxu0
        %292 = vdwg.mxu0
        %v293 = vxor.u32 %v290, 2147483648
        %v294 = vmul.f32 %v293, 1.442695
        %v295 = vpow.pop %v294
        %v296 = vadd.f32 %v295, 1.0
        %v297 = vrcp.pop %v296
        %v298 = vmul.f32 1.0, %v297
        %v299 = vmul.f32 %v213, %v298
        %300 = vst.msk [vmem:[%s212] sm:$0xff] %vm219, %v299
        %s301 = sand.u32 %s97, 1
        %s302 = scalar_lea.sflag [#allocation4], %s301
        %s303 = sand.u32 %s97, 1
        %s304 = smul.addr %s303, 8
        %s305 = scalar_lea.vmem [#allocation8], %s304
        // Predicated region
        $region45: #{tpu_custom_call.1} parent=31 // pred_check
          %p306 = pneg %p107
        $region46: #{tpu_custom_call.1} parent=31 // pred_check_branch
          %308 = sbr.rel (%p306) target = $region48
        $region47: #{tpu_custom_call.1} parent=31 // pred_region
          %s310 = ssub.s32 128, 128
          %311 = vsyncadd %s302, %s310
          %s312 = smul.addr %s21, 128
          %s313 = scalar_lea.hbm %s3, %s312
          %s315 = sshll.u32 %s305, 4
          %s316 = int_to_ptr.vmem [resolvable:$true] %s315
          %318 = dma.vmem_to_hbm [thread:$0]  %s316, 128, %s313, %s302
        $region48: #{tpu_custom_call.1} parent=31 // pred_fallthru
          _
      $region32: #{tpu_custom_call.1} parent=5 // pred_fallthru
        _
      %p319 = scmp.le.s32.totalorder 2, %s16
      // Predicated region
      $region49: #{tpu_custom_call.1} parent=5 // pred_check
        %p320 = pneg %p319
      $region50: #{tpu_custom_call.1} parent=5 // pred_check_branch
        %322 = sbr.rel (%p320) target = $region52
      $region51: #{tpu_custom_call.1} parent=5 // pred_region
        %s323 = ssub.s32 %s16, 2
        // Predicated region
        $region53: #{tpu_custom_call.1} parent=51 // pred_check
          %p324 = pneg %p113
        $region54: #{tpu_custom_call.1} parent=51 // pred_check_branch
          %326 = sbr.rel (%p324) target = $region56
        $region55: #{tpu_custom_call.1} parent=51 // pred_region
          %s327 = sand.u32 %s98, 1
          %s328 = scalar_lea.sflag [#allocation4], %s327
          %s329 = sand.u32 %s98, 1
          %s330 = smul.addr %s329, 8
          %s331 = scalar_lea.vmem [#allocation8], %s330
          %332 = dma.done %s328, 128
        $region56: #{tpu_custom_call.1} parent=51 // pred_fallthru
          _
      $region52: #{tpu_custom_call.1} parent=5 // pred_fallthru
        _
    $region6: #{tpu_custom_call.1} parent=1 // loop_footer
      %s20 = sadd.s32 1, %s16
    $region7: #{tpu_custom_call.1} parent=1 // loop_footer_branch
      %15 = sbr.rel target = $region3
    $region8: #{tpu_custom_call.1} parent=1 // loop_exit
      _
    %333 = vsyncpa [#allocation3], 1
    %s334 = scalar_lea.sflag [#allocation3], 1
    %335 = vsyncpa %s334, 1
    %336 = vsyncpa [#allocation6], 1
    %337 = vsyncpa [#allocation4], 1
    %s338 = scalar_lea.sflag [#allocation4], 1
    %339 = vsyncpa %s338, 1

// kernel: tpu_custom_call.1
$region0: #{tpu_custom_call.1}
  #allocation0 [shape = 'u32[]', space=smem, size = 0x4, offset = 0x4, fixed_abs, tag = 'smem constant byte address 0x4 - core index']
  #allocation1 [shape = 'u32[144,128]{1,0:T(1,128)}', space=vmem, size = 0x12000, scoped, tag = 'internal scratch']
  %s0 = inlined_call_operand.hbm [shape: f32[16,32], index: 0, kind: input, shape index: {}]
  %s1 = inlined_call_operand.hbm [shape: f32[8,32], index: 1, kind: input, shape index: {}]
  %s2 = inlined_call_operand.hbm [shape: f32[32,32], index: 2, kind: input, shape index: {}]
  %s3 = inlined_call_operand.hbm [shape: f32[16,32], index: 3, kind: output, shape index: {}]
  %s4 = sld [smem:[#allocation0]]
  $region57: #{tpu_custom_call.1} parent=0
    _
  %s6 = ssub.s32 1, %s4
  %s7 = scalar_select 0, %s6, %s4
  $region1: #{tpu_custom_call.1} parent=0
    #allocation2 [shape = 'u8[8192]{0}', space=vmem, size = 0x2000, scoped, tag = 'input window, operand 0']
    #allocation3 [shape = 's32[2]{0}', space=sflag, size = 0x8, scoped, tag = 'scoped memory for tpu_custom_call.1']
    #allocation4 [shape = 's32[2]{0}', space=sflag, size = 0x8, scoped, tag = 'scoped memory for tpu_custom_call.1']
    #allocation5 [shape = 'u8[4096]{0}', space=vmem, size = 0x1000, scoped, tag = 'input window, operand 1, single buffered']
    #allocation6 [shape = 's32[1]{0}', space=sflag, size = 0x4, scoped, tag = 'scoped memory for tpu_custom_call.1']
    #allocation7 [shape = 'u8[16384]{0}', space=vmem, size = 0x4000, scoped, tag = 'input window, operand 2, single buffered']
    #allocation8 [shape = 'u8[8192]{0}', space=vmem, size = 0x2000, scoped, tag = 'output window, operand 0']
    %8 = vsyncpa [#allocation3], 0
    %s9 = scalar_lea.sflag [#allocation3], 1
    %10 = vsyncpa %s9, 0
    %11 = vsyncpa [#allocation6], 0
    %12 = vsyncpa [#allocation4], 0
    %s13 = scalar_lea.sflag [#allocation4], 1
    %14 = vsyncpa %s13, 0
    loop: start=0, step=1, limit=4
    $region2: #{tpu_custom_call.1} parent=1 // loop_pre_header
      _
    $region3: #{tpu_custom_call.1} parent=1 // loop_header
      %s16 = sphi 0, %s20
      %p17 = scmp.ge.s32.totalorder %s16, 4
      %s26 = sphi 0, %s28
      %s29 = sphi 0, %s26
      %s30 = sphi 0, %s29
      %s46 = sphi 0, %s30
      %s50 = sphi 0, %s50
      %s52 = sphi 0, %s50
      %s53 = sphi 0, %s52
      %s67 = sphi 0, %s53
      %s71 = sphi 0, %s71
      %s73 = sphi 0, %s71
      %s74 = sphi 0, %s73
      %s88 = sphi 0, %s74
      %s94 = sphi 0, %s96
      %s97 = sphi 0, %s94
      %s98 = sphi 0, %s97
      %s114 = sphi 0, %s98
    $region4: #{tpu_custom_call.1} parent=1 // loop_header_branch
      %19 = sbr.rel (%p17) target = $region8
    $region5: #{tpu_custom_call.1} parent=1 // loop_body
      %s21 = ssub.s32 %s16, 1
      %s22 = ssub.s32 %s16, 2
      %s23 = sadd.s32 %s16, 1
      %s24 = ssub.s32 %s16, %s23
      %p25 = scmp.eq.s32.totalorder %s24, 0
      %s27 = sadd.s32 %s26, 1
      %s28 = scalar_select %p25, %s26, %s27
      %p31 = pneg %p25
      %p32 = scmp.eq.s32.totalorder %s16, 1
      %p33 = por %p31, %p32
      %p34 = scmp.ne.s32.totalorder %s26, %s29
      %p35 = scmp.eq.s32.totalorder %s16, 0
      %p36 = por %p34, %p35
      %p37 = scmp.ne.s32.totalorder %s26, %s29
      %p38 = scmp.eq.s32.totalorder %s21, 1
      %p39 = por %p37, %p38
      %p40 = scmp.ne.s32.totalorder %s29, %s30
      %p41 = scmp.eq.s32.totalorder %s21, 0
      %p42 = por %p40, %p41
      %p43 = scmp.ne.s32.totalorder %s29, %s30
      %p44 = scmp.eq.s32.totalorder %s22, 1
      %p45 = por %p43, %p44
      %p47 = scmp.ne.s32.totalorder %s30, %s46
      %p48 = scmp.eq.s32.totalorder %s22, 0
      %p49 = por %p47, %p48
      %s51 = sadd.s32 %s50, 1
      %p54 = scmp.eq.s32.totalorder %s16, 1
      %p55 = scmp.ne.s32.totalorder %s50, %s52
      %p56 = scmp.eq.s32.totalorder %s16, 0
      %p57 = por %p55, %p56
      %p58 = scmp.ne.s32.totalorder %s50, %s52
      %p59 = scmp.eq.s32.totalorder %s21, 1
      %p60 = por %p58, %p59
      %p61 = scmp.ne.s32.totalorder %s52, %s53
      %p62 = scmp.eq.s32.totalorder %s21, 0
      %p63 = por %p61, %p62
      %p64 = scmp.ne.s32.totalorder %s52, %s53
      %p65 = scmp.eq.s32.totalorder %s22, 1
      %p66 = por %p64, %p65
      %p68 = scmp.ne.s32.totalorder %s53, %s67
      %p69 = scmp.eq.s32.totalorder %s22, 0
      %p70 = por %p68, %p69
      %s72 = sadd.s32 %s71, 1
      %p75 = scmp.eq.s32.totalorder %s16, 1
      %p76 = scmp.ne.s32.totalorder %s71, %s73
      %p77 = scmp.eq.s32.totalorder %s16, 0
      %p78 = por %p76, %p77
      %p79 = scmp.ne.s32.totalorder %s71, %s73
      %p80 = scmp.eq.s32.totalorder %s21, 1
      %p81 = por %p79, %p80
      %p82 = scmp.ne.s32.totalorder %s73, %s74
      %p83 = scmp.eq.s32.totalorder %s21, 0
      %p84 = por %p82, %p83
      %p85 = scmp.ne.s32.totalorder %s73, %s74
      %p86 = scmp.eq.s32.totalorder %s22, 1
      %p87 = por %p85, %p86
      %p89 = scmp.ne.s32.totalorder %s74, %s88
      %p90 = scmp.eq.s32.totalorder %s22, 0
      %p91 = por %p89, %p90
      %s92 = ssub.s32 %s16, %s23
      %p93 = scmp.eq.s32.totalorder %s92, 0
      %s95 = sadd.s32 %s94, 1
      %s96 = scalar_select %p93, %s94, %s95
      %p99 = pneg %p93
      %p100 = scmp.eq.s32.totalorder %s16, 1
      %p101 = por %p99, %p100
      %p102 = scmp.ne.s32.totalorder %s94, %s97
      %p103 = scmp.eq.s32.totalorder %s16, 0
      %p104 = por %p102, %p103
      %p105 = scmp.ne.s32.totalorder %s94, %s97
      %p106 = scmp.eq.s32.totalorder %s21, 1
      %p107 = por %p105, %p106
      %p108 = scmp.ne.s32.totalorder %s97, %s98
      %p109 = scmp.eq.s32.totalorder %s21, 0
      %p110 = por %p108, %p109
      %p111 = scmp.ne.s32.totalorder %s97, %s98
      %p112 = scmp.eq.s32.totalorder %s22, 1
      %p113 = por %p111, %p112
      %p115 = scmp.ne.s32.totalorder %s98, %s114
      %p116 = scmp.eq.s32.totalorder %s22, 0
      %p117 = por %p115, %p116
      %p118 = scmp.le.s32.totalorder 1, %s16
      %p119 = scmp.lt.s32.totalorder %s16, 3
      %p120 = pnand %p118, %p119
      %p121 = pneg %p120
      // Predicated region
      $region9: #{tpu_custom_call.1} parent=5 // pred_check
        _
      $region10: #{tpu_custom_call.1} parent=5 // pred_check_branch
        %123 = sbr.rel (%p120) target = $region12
      $region11: #{tpu_custom_call.1} parent=5 // pred_region
        %s124 = ssub.s32 %s16, 1
        // Predicated region
        $region13: #{tpu_custom_call.1} parent=11 // pred_check
          %p125 = pneg %p63
        $region14: #{tpu_custom_call.1} parent=11 // pred_check_branch
          %127 = sbr.rel (%p125) target = $region16
        $region15: #{tpu_custom_call.1} parent=11 // pred_region
          %s129 = ssub.s32 128, 128
          %130 = vsyncadd [#allocation6], %s129
          %s132 = sshll.u32 [#allocation5], 4
          %s133 = int_to_ptr.vmem [resolvable:$true] %s132
          %135 = dma.hbm_to_vmem [thread:$0]  %s1, 128, %s133, [#allocation6]
        $region16: #{tpu_custom_call.1} parent=11 // pred_fallthru
          _
        // Predicated region
        $region17: #{tpu_custom_call.1} parent=11 // pred_check
          %p136 = pneg %p84
        $region18: #{tpu_custom_call.1} parent=11 // pred_check_branch
          %138 = sbr.rel (%p136) target = $region20
        $region19: #{tpu_custom_call.1} parent=11 // pred_region
          %s140 = ssub.s32 512, 512
          %141 = vsyncadd [#allocation6], %s140
          %s142 = sshll.u32 [#allocation7], 4
          %s143 = int_to_ptr.vmem [resolvable:$true] %s142
          %148 = dma.hbm_to_vmem [thread:$0]  %s2, 512, %s143, [#allocation6], 128, 128, 8
        $region20: #{tpu_custom_call.1} parent=11 // pred_fallthru
          _
      $region12: #{tpu_custom_call.1} parent=5 // pred_fallthru
        _
      %p149 = scmp.lt.s32.totalorder %s16, 2
      // Predicated region
      $region21: #{tpu_custom_call.1} parent=5 // pred_check
        %p150 = pneg %p149
      $region22: #{tpu_custom_call.1} parent=5 // pred_check_branch
        %152 = sbr.rel (%p150) target = $region24
      $region23: #{tpu_custom_call.1} parent=5 // pred_region
        // Predicated region
        $region25: #{tpu_custom_call.1} parent=23 // pred_check
          %p153 = pneg %p36
        $region26: #{tpu_custom_call.1} parent=23 // pred_check_branch
          %155 = sbr.rel (%p153) target = $region28
        $region27: #{tpu_custom_call.1} parent=23 // pred_region
          %s156 = sand.u32 %s26, 1
          %s157 = scalar_lea.sflag [#allocation3], %s156
          %s158 = sand.u32 %s26, 1
          %s159 = smul.addr %s158, 8
          %s160 = scalar_lea.vmem [#allocation2], %s159
          %s162 = ssub.s32 128, 128
          %163 = vsyncadd %s157, %s162
          %s164 = smul.addr %s16, 128
          %s165 = scalar_lea.hbm %s0, %s164
          %s167 = sshll.u32 %s160, 4
          %s168 = int_to_ptr.vmem [resolvable:$true] %s167
          %170 = dma.hbm_to_vmem [thread:$0]  %s165, 128, %s168, %s157
        $region28: #{tpu_custom_call.1} parent=23 // pred_fallthru
          _
      $region24: #{tpu_custom_call.1} parent=5 // pred_fallthru
        _
      %p171 = scmp.le.s32.totalorder 1, %s16
      %p172 = scmp.lt.s32.totalorder %s16, 3
      %p173 = pnand %p171, %p172
      %p174 = pneg %p173
      // Predicated region
      $region29: #{tpu_custom_call.1} parent=5 // pred_check
        _
      $region30: #{tpu_custom_call.1} parent=5 // pred_check_branch
        %176 = sbr.rel (%p173) target = $region32
      $region31: #{tpu_custom_call.1} parent=5 // pred_region
        %s177 = ssub.s32 %s16, 1
        %s178 = sand.u32 %s29, 1
        %s179 = scalar_lea.sflag [#allocation3], %s178
        %s180 = sand.u32 %s29, 1
        %s181 = smul.addr %s180, 8
        %s182 = scalar_lea.vmem [#allocation2], %s181
        // Predicated region
        $region33: #{tpu_custom_call.1} parent=31 // pred_check
          %p183 = pneg %p42
        $region34: #{tpu_custom_call.1} parent=31 // pred_check_branch
          %185 = sbr.rel (%p183) target = $region36
        $region35: #{tpu_custom_call.1} parent=31 // pred_region
          %186 = dma.done %s179, 128
        $region36: #{tpu_custom_call.1} parent=31 // pred_fallthru
          _
        // Predicated region
        $region37: #{tpu_custom_call.1} parent=31 // pred_check
          %p187 = pneg %p63
        $region38: #{tpu_custom_call.1} parent=31 // pred_check_branch
          %189 = sbr.rel (%p187) target = $region40
        $region39: #{tpu_custom_call.1} parent=31 // pred_region
          %190 = dma.done [#allocation6], 128
        $region40: #{tpu_custom_call.1} parent=31 // pred_fallthru
          _
        // Predicated region
        $region41: #{tpu_custom_call.1} parent=31 // pred_check
          %p191 = pneg %p84
        $region42: #{tpu_custom_call.1} parent=31 // pred_check_branch
          %193 = sbr.rel (%p191) target = $region44
        $region43: #{tpu_custom_call.1} parent=31 // pred_region
          %194 = dma.done [#allocation6], 512
        $region44: #{tpu_custom_call.1} parent=31 // pred_fallthru
          _
        %s195 = sand.u32 %s29, 1
        %s196 = scalar_lea.sflag [#allocation3], %s195
        %s197 = sand.u32 %s29, 1
        %s198 = smul.addr %s197, 8
        %s199 = scalar_lea.vmem [#allocation2], %s198
        %p200 = pneg %p42
        %p201 = pneg %p39
        %p202 = pneg %p63
        %p203 = pneg %p60
        %p204 = pneg %p84
        %p205 = pneg %p81
        %p206 = pneg %p110
        %p207 = pneg %p107
        %s208 = sand.u32 %s97, 1
        %s209 = scalar_lea.sflag [#allocation4], %s208
        %s210 = sand.u32 %s97, 1
        %s211 = smul.addr %s210, 8
        %s212 = scalar_lea.vmem [#allocation8], %s211
        %v213 = vld [vmem:[%s182] sm:$0xff]
        %v214 = vld [vmem:[#allocation7] sm:$0xff]
        %v215 = vld [vmem:[#allocation7 + $0x8] sm:$0xff]
        %v216 = vld [vmem:[#allocation7 + $0x10] sm:$0xff]
        %v217 = vld [vmem:[#allocation7 + $0x18] sm:$0xff]
        %v218 = vld [vmem:[#allocation5] sm:$0xff]
        %vm219 = vcmask 261120
        %v221 = vsel %vm219, %v213, 0
        %223 = vmatprep.subr.mxu0 0.0
        %224 = vmatpush1.msra.mxu0 0.0
        %225 = vmatprep.subr.mxu0 0.0
        %226 = vmatpush1.msra.mxu0 0.0
        %227 = vmatprep.subr.mxu0 0.0
        %228 = vmatpush1.msra.mxu0 0.0
        %229 = vmatprep.subr.mxu0 0.0
        %230 = vmatpush1.msra.mxu0 0.0
        %231 = vmatprep.subr.mxu0 0.0
        %232 = vmatpush1.msra.mxu0 0.0
        %233 = vmatprep.subr.mxu0 0.0
        %234 = vmatpush1.msra.mxu0 0.0
        %235 = vmatprep.subr.mxu0 0.0
        %236 = vmatpush1.msra.mxu0 0.0
        %237 = vmatprep.subr.mxu0 0.0
        %238 = vmatpush1.msra.mxu0 0.0
        %239 = vmatprep.subr.mxu0 0.0
        %240 = vmatpush1.msra.mxu0 0.0
        %241 = vmatprep.subr.mxu0 0.0
        %242 = vmatpush1.msra.mxu0 0.0
        %243 = vmatprep.subr.mxu0 0.0
        %244 = vmatpush1.msra.mxu0 0.0
        %245 = vmatprep.subr.mxu0 0.0
        %246 = vmatpush1.msra.mxu0 0.0
        %247 = vmatprep.subr.mxu0 0.0
        %248 = vmatpush1.msra.mxu0 %v217
        %249 = vmatprep.subr.mxu0 0.0
        %250 = vmatpush1.msra.mxu0 %v216
        %251 = vmatprep.subr.mxu0 0.0
        %252 = vmatpush1.msra.mxu0 %v215
        %253 = vmatprep.subr.mxu0 0.0
        %254 = vmatpush1.msra.mxu0 %v214
        %255 = vmatprep.subr.mxu0 0.0
        %256 = vmatpush2.msra.mxu0 0.0
        %257 = vmatprep.subr.mxu0 0.0
        %258 = vmatpush2.msra.mxu0 0.0
        %259 = vmatprep.subr.mxu0 0.0
        %260 = vmatpush2.msra.mxu0 0.0
        %261 = vmatprep.subr.mxu0 0.0
        %262 = vmatpush2.msra.mxu0 0.0
        %263 = vmatprep.subr.mxu0 0.0
        %264 = vmatpush2.msra.mxu0 0.0
        %265 = vmatprep.subr.mxu0 0.0
        %266 = vmatpush2.msra.mxu0 0.0
        %267 = vmatprep.subr.mxu0 0.0
        %268 = vmatpush2.msra.mxu0 0.0
        %269 = vmatprep.subr.mxu0 0.0
        %270 = vmatpush2.msra.mxu0 0.0
        %271 = vmatprep.subr.mxu0 0.0
        %272 = vmatpush2.msra.mxu0 0.0
        %273 = vmatprep.subr.mxu0 0.0
        %274 = vmatpush2.msra.mxu0 0.0
        %275 = vmatprep.subr.mxu0 0.0
        %276 = vmatpush2.msra.mxu0 0.0
        %277 = vmatprep.subr.mxu0 0.0
        %278 = vmatpush2.msra.mxu0 0.0
        %279 = vmatprep.subr.mxu0 0.0
        %280 = vmatpush2.msra.mxu0 0.0
        %281 = vmatprep.subr.mxu0 0.0
        %282 = vmatpush2.msra.mxu0 0.0
        %283 = vmatprep.subr.mxu0 0.0
        %284 = vmatpush2.msra.mxu0 0.0
        %285 = vmatprep.subr.mxu0 0.0
        %286 = vmatpush2.msra.mxu0 0.0
        %287 = vmatprep.mubr.f32.mxu0 0.0
        %288 = vmatmul.mubr.f32.gmra.mxu0 %v221
        %v289 = vpop.f32.mrf.mxu0
        %v290 = vadd.f32 %v218, %v289
        %v291 = vpop.f32.mrf.mxu0
        %292 = vdwg.mxu0
        %v293 = vxor.u32 %v290, 2147483648
        %v294 = vmul.f32 %v293, 1.442695
        %v295 = vpow.pop %v294
        %v296 = vadd.f32 %v295, 1.0
        %v297 = vrcp.pop %v296
        %v298 = vmul.f32 1.0, %v297
        %v299 = vmul.f32 %v213, %v298
        %300 = vst.msk [vmem:[%s212] sm:$0xff] %vm219, %v299
        %s301 = sand.u32 %s97, 1
        %s302 = scalar_lea.sflag [#allocation4], %s301
        %s303 = sand.u32 %s97, 1
        %s304 = smul.addr %s303, 8
        %s305 = scalar_lea.vmem [#allocation8], %s304
        // Predicated region
        $region45: #{tpu_custom_call.1} parent=31 // pred_check
          %p306 = pneg %p107
        $region46: #{tpu_custom_call.1} parent=31 // pred_check_branch
          %308 = sbr.rel (%p306) target = $region48
        $region47: #{tpu_custom_call.1} parent=31 // pred_region
          %s310 = ssub.s32 128, 128
          %311 = vsyncadd %s302, %s310
          %s312 = smul.addr %s21, 128
          %s313 = scalar_lea.hbm %s3, %s312
          %s315 = sshll.u32 %s305, 4
          %s316 = int_to_ptr.vmem [resolvable:$true] %s315
          %318 = dma.vmem_to_hbm [thread:$0]  %s316, 128, %s313, %s302
        $region48: #{tpu_custom_call.1} parent=31 // pred_fallthru
          _
      $region32: #{tpu_custom_call.1} parent=5 // pred_fallthru
        _
      %p319 = scmp.le.s32.totalorder 2, %s16
      // Predicated region
      $region49: #{tpu_custom_call.1} parent=5 // pred_check
        %p320 = pneg %p319
      $region50: #{tpu_custom_call.1} parent=5 // pred_check_branch
        %322 = sbr.rel (%p320) target = $region52
      $region51: #{tpu_custom_call.1} parent=5 // pred_region
        %s323 = ssub.s32 %s16, 2
        // Predicated region
        $region53: #{tpu_custom_call.1} parent=51 // pred_check
          %p324 = pneg %p113
        $region54: #{tpu_custom_call.1} parent=51 // pred_check_branch
          %326 = sbr.rel (%p324) target = $region56
        $region55: #{tpu_custom_call.1} parent=51 // pred_region
          %s327 = sand.u32 %s98, 1
          %s328 = scalar_lea.sflag [#allocation4], %s327
          %s329 = sand.u32 %s98, 1
          %s330 = smul.addr %s329, 8
          %s331 = scalar_lea.vmem [#allocation8], %s330
          %332 = dma.done %s328, 128
        $region56: #{tpu_custom_call.1} parent=51 // pred_fallthru
          _
      $region52: #{tpu_custom_call.1} parent=5 // pred_fallthru
        _
    $region6: #{tpu_custom_call.1} parent=1 // loop_footer
      %s20 = sadd.s32 1, %s16
    $region7: #{tpu_custom_call.1} parent=1 // loop_footer_branch
      %15 = sbr.rel target = $region3
    $region8: #{tpu_custom_call.1} parent=1 // loop_exit
      _
    %333 = vsyncpa [#allocation3], 1
    %s334 = scalar_lea.sflag [#allocation3], 1
    %335 = vsyncpa %s334, 1
    %336 = vsyncpa [#allocation6], 1
    %337 = vsyncpa [#allocation4], 1
    %s338 = scalar_lea.sflag [#allocation4], 1
    %339 = vsyncpa %s338, 1

</llo_original>
